<compile_context>
chip_gen: v6e
topology: v6e:2x2x1
jax: 0.10.0
libtpu: 0.0.40
codegen_flags: <defaults>
</compile_context>

<pallas_src>
import functools

import jax
import jax.numpy as jnp
from jax.experimental import pallas as pl
from jax.experimental.pallas import tpu as pltpu

CHAR_EMBED = 50   # self.char_embed_size in the module
KERNEL_K = 5      # standard CS224N CNN kernel size


def _round_up(x, m):
    return (x + m - 1) // m * m


def _char_cnn_highway_kernel(x_ref, wc_ref, bc_ref, whw_ref, bhw_ref, o_ref,
                             *, word_len, char_dim, k_taps):
    # x_ref  : (block_n, M*C) bf16  -- flattened channels-last chars per word
    # wc_ref : (K*C, E)       bf16  -- folded conv taps
    # bc_ref : (1, E)         f32
    # whw_ref: (E, 2E)        bf16  -- [w_proj | w_gate], pre-transposed for x @ W
    # bhw_ref: (1, 2E)        f32   -- [b_proj | b_gate]
    # o_ref  : (block_n, E)   f32
    kc, e = wc_ref.shape
    L = word_len - k_taps + 1          # conv output length (no padding, stride 1)

    x = x_ref[...]                     # (n, M*C) bf16
    wc = wc_ref[...]                   # (K*C, E) bf16

    def window_dot(t):
        # Chars t .. t+K-1 are contiguous lanes in the flattened layout.
        w = x[:, t * char_dim: t * char_dim + kc]      # (n, K*C)
        return jnp.dot(w, wc, preferred_element_type=jnp.float32)

    # Conv1d fused with max-pool over positions (K taps folded into one contraction).
    hmax = window_dot(0)
    for t in range(1, L):              # static unrolled loop (small L)
        hmax = jnp.maximum(hmax, window_dot(t))

    # Bias and ReLU hoisted out of the loop: max_t relu(c_t + b) == relu(max_t c_t + b)
    h = jnp.maximum(hmax + bc_ref[...], 0.0)           # (n, E) f32

    # Highway network: fused proj+gate matmul, then split columns.
    z = jnp.dot(h.astype(whw_ref.dtype), whw_ref[...],
                preferred_element_type=jnp.float32) + bhw_ref[...]   # (n, 2E)
    proj = jnp.maximum(z[:, :e], 0.0)
    gate = jax.nn.sigmoid(z[:, e:])
    out = h + gate * (proj - h)        # == gate*proj + (1-gate)*h

    # Dropout(p=0.3): eval-mode identity (deterministic forward).
    # TODO(synk): training-mode dropout (pltpu.prng_*) intentionally not applied.
    o_ref[...] = out.astype(o_ref.dtype)


def char_cnn_embed(x_flat, w_conv_flat, b_conv, w_hw, b_hw,
                   *, word_len, char_dim, k_taps, block_n=512):
    """x_flat: (N, M*C) bf16, N = sentence_length * batch_size. Returns (N, E) f32."""
    N, MC = x_flat.shape
    KC, E = w_conv_flat.shape
    assert word_len >= k_taps, "max_word_length must be >= conv kernel size"
    assert MC == word_len * char_dim and KC == k_taps * char_dim

    # Large tiles (>=512 rows when N allows) amortize grid-step overhead; pad N up.
    block_n = min(block_n, _round_up(N, 8))
    N_pad = _round_up(N, block_n)
    if N_pad != N:
        x_flat = jnp.pad(x_flat, ((0, N_pad - N), (0, 0)))
    grid = (N_pad // block_n,)

    kernel = functools.partial(
        _char_cnn_highway_kernel,
        word_len=word_len, char_dim=char_dim, k_taps=k_taps)

    out = pl.pallas_call(
        kernel,
        out_shape=jax.ShapeDtypeStruct((N_pad, E), jnp.float32),
        grid_spec=pltpu.PrefetchScalarGridSpec(
            num_scalar_prefetch=0,
            grid=grid,
            in_specs=[
                pl.BlockSpec((block_n, MC), lambda i: (i, 0)),   # per-tile words
                pl.BlockSpec((KC, E), lambda i: (0, 0)),         # folded conv weight
                pl.BlockSpec((1, E), lambda i: (0, 0)),          # conv bias
                pl.BlockSpec((E, 2 * E), lambda i: (0, 0)),      # fused highway weight
                pl.BlockSpec((1, 2 * E), lambda i: (0, 0)),      # fused highway bias
            ],
            out_specs=pl.BlockSpec((block_n, E), lambda i: (i, 0)),
        ),
        compiler_params=pltpu.CompilerParams(
            dimension_semantics=("parallel",)),
    )(x_flat, w_conv_flat, b_conv, w_hw, b_hw)
    return out[:N]


def model_embeddings_forward(input_ids, emb_table, params, *, block_n=512):
    """input_ids: (S, B, M) int32 char indices -> (S, B, E) float32."""
    S, B, M = input_ids.shape
    K, C, E = params["w_conv"].shape

    # 1) embedding lookup (gather) -- plain JAX glue; bf16 halves kernel DMA bytes.
    emb_bf16 = emb_table.astype(jnp.bfloat16)
    x = emb_bf16[input_ids]                                  # (S, B, M, C)
    x_flat = x.reshape(S * B, M * C)                         # channels-last, flattened

    # Fold conv taps / fuse highway weights in the wrapper (one-time, outside kernel).
    w_conv_flat = params["w_conv"].reshape(K * C, E).astype(jnp.bfloat16)
    b_conv = params["b_conv"].astype(jnp.float32)
    w_hw = jnp.concatenate([params["w_proj"], params["w_gate"]], axis=1).astype(jnp.bfloat16)
    b_hw = jnp.concatenate([params["b_proj"], params["b_gate"]], axis=1).astype(jnp.float32)

    out_flat = char_cnn_embed(
        x_flat, w_conv_flat, b_conv, w_hw, b_hw,
        word_len=M, char_dim=C, k_taps=K, block_n=block_n)
    return out_flat.reshape(S, B, E)


def _reference_forward(input_ids, emb_table, params):
    """Pure-JAX f32 reference with identical semantics (for a sanity check)."""
    S, B, M = input_ids.shape
    K, C, E = params["w_conv"].shape
    x = emb_table[input_ids].astype(jnp.float32).reshape(S * B, M, C)
    L = M - K + 1
    conv = jnp.stack(
        [jnp.einsum("nkc,kce->ne", x[:, t:t + K, :], params["w_conv"]) for t in range(L)],
        axis=1) + params["b_conv"][None, :, :]               # (N, L, E)
    h = jnp.max(jnp.maximum(conv, 0.0), axis=1)              # relu + max-pool
    proj = jnp.maximum(h @ params["w_proj"] + params["b_proj"], 0.0)
    gate = jax.nn.sigmoid(h @ params["w_gate"] + params["b_gate"])
    out = gate * proj + (1.0 - gate) * h
    return out.reshape(S, B, E)


if __name__ == "__main__":
    key = jax.random.PRNGKey(0)
    embed_size = 32
    vocab_size = 30
    pad_idx = 0
    sent_len, batch, max_word_len = 8, 2, 12   # N = 16 words

    ks = jax.random.split(key, 8)
    emb_table = 0.1 * jax.random.normal(ks[0], (vocab_size, CHAR_EMBED), jnp.float32)
    emb_table = emb_table.at[pad_idx].set(0.0)  # nn.Embedding padding_idx row is zero

    params = {
        # torch Conv1d weight is (E, C, K); stored here as (K, C, E)
        "w_conv": 0.05 * jax.random.normal(ks[1], (KERNEL_K, CHAR_EMBED, embed_size), jnp.float32),
        "b_conv": 0.05 * jax.random.normal(ks[2], (1, embed_size), jnp.float32),
        # torch Linear computes x @ W.T + b; we store W.T directly
        "w_proj": 0.05 * jax.random.normal(ks[3], (embed_size, embed_size), jnp.float32),
        "b_proj": 0.05 * jax.random.normal(ks[4], (1, embed_size), jnp.float32),
        "w_gate": 0.05 * jax.random.normal(ks[5], (embed_size, embed_size), jnp.float32),
        "b_gate": 0.05 * jax.random.normal(ks[6], (1, embed_size), jnp.float32),
    }

    input_ids = jax.random.randint(ks[7], (sent_len, batch, max_word_len), 0, vocab_size)

    out = model_embeddings_forward(input_ids, emb_table, params)
    jax.block_until_ready(out)
    assert out.shape == (sent_len, batch, embed_size)
    assert out.dtype == jnp.float32

    ref = _reference_forward(input_ids, emb_table, params)
    max_err = float(jnp.max(jnp.abs(out - ref)))
    assert max_err < 2e-2, f"kernel/reference mismatch: max abs err = {max_err}"

    print("KERNEL_OK")
</pallas_src>

<mosaic_0001>
module attributes {stable_mosaic.version = 11 : i64} {
  func.func @_char_cnn_highway_kernel(%arg0: i32, %arg1: memref<16x600xbf16, #tpu.memory_space<vmem>>, %arg2: memref<250x32xbf16, #tpu.memory_space<vmem>>, %arg3: memref<1x32xf32, #tpu.memory_space<vmem>>, %arg4: memref<32x64xbf16, #tpu.memory_space<vmem>>, %arg5: memref<1x64xf32, #tpu.memory_space<vmem>>, %arg6: memref<16x32xf32, #tpu.memory_space<vmem>>) attributes {dimension_semantics = [#tpu.dimension_semantics<parallel>], iteration_bounds = array<i64: 1>, scalar_prefetch = 0 : i64, scratch_operands = 0 : i64, tpu.core_type = #tpu.core_type<tc>, window_params = [{transform_indices = @transform_0, window_bounds = array<i64: 16, 600>}, {pipeline_mode = #tpu.pipeline_mode<synchronous>, transform_indices = @transform_1, window_bounds = array<i64: 250, 32>}, {pipeline_mode = #tpu.pipeline_mode<synchronous>, transform_indices = @transform_2, window_bounds = array<i64: 1, 32>}, {pipeline_mode = #tpu.pipeline_mode<synchronous>, transform_indices = @transform_3, window_bounds = array<i64: 32, 64>}, {pipeline_mode = #tpu.pipeline_mode<synchronous>, transform_indices = @transform_4, window_bounds = array<i64: 1, 64>}, {transform_indices = @transform_5, window_bounds = array<i64: 16, 32>}]} {
    %c0 = arith.constant 0 : index
    %c0_0 = arith.constant 0 : index
    %0 = vector.load %arg1[%c0, %c0_0] : memref<16x600xbf16, #tpu.memory_space<vmem>>, vector<16x600xbf16>
    %c0_1 = arith.constant 0 : index
    %c0_2 = arith.constant 0 : index
    %1 = vector.load %arg2[%c0_1, %c0_2] : memref<250x32xbf16, #tpu.memory_space<vmem>>, vector<250x32xbf16>
    %2 = vector.extract_strided_slice %0 {offsets = [0, 0], sizes = [16, 250], strides = [1, 1]} : vector<16x600xbf16> to vector<16x250xbf16>
    %cst = arith.constant dense<0.000000e+00> : vector<16x32xf32>
    %3 = tpu.matmul %2, %1, %cst {dimension_numbers = #tpu.dot_dimension_numbers<[1], [0], [0], [1], [0, 0, 1, 1], [], []>} : vector<16x250xbf16>, vector<250x32xbf16>, vector<16x32xf32> -> vector<16x32xf32>
    %4 = vector.extract_strided_slice %0 {offsets = [0, 50], sizes = [16, 250], strides = [1, 1]} : vector<16x600xbf16> to vector<16x250xbf16>
    %cst_3 = arith.constant dense<0.000000e+00> : vector<16x32xf32>
    %5 = tpu.matmul %4, %1, %cst_3 {dimension_numbers = #tpu.dot_dimension_numbers<[1], [0], [0], [1], [0, 0, 1, 1], [], []>} : vector<16x250xbf16>, vector<250x32xbf16>, vector<16x32xf32> -> vector<16x32xf32>
    %6 = arith.maximumf %3, %5 : vector<16x32xf32>
    %7 = vector.extract_strided_slice %0 {offsets = [0, 100], sizes = [16, 250], strides = [1, 1]} : vector<16x600xbf16> to vector<16x250xbf16>
    %cst_4 = arith.constant dense<0.000000e+00> : vector<16x32xf32>
    %8 = tpu.matmul %7, %1, %cst_4 {dimension_numbers = #tpu.dot_dimension_numbers<[1], [0], [0], [1], [0, 0, 1, 1], [], []>} : vector<16x250xbf16>, vector<250x32xbf16>, vector<16x32xf32> -> vector<16x32xf32>
    %9 = arith.maximumf %6, %8 : vector<16x32xf32>
    %10 = vector.extract_strided_slice %0 {offsets = [0, 150], sizes = [16, 250], strides = [1, 1]} : vector<16x600xbf16> to vector<16x250xbf16>
    %cst_5 = arith.constant dense<0.000000e+00> : vector<16x32xf32>
    %11 = tpu.matmul %10, %1, %cst_5 {dimension_numbers = #tpu.dot_dimension_numbers<[1], [0], [0], [1], [0, 0, 1, 1], [], []>} : vector<16x250xbf16>, vector<250x32xbf16>, vector<16x32xf32> -> vector<16x32xf32>
    %12 = arith.maximumf %9, %11 : vector<16x32xf32>
    %13 = vector.extract_strided_slice %0 {offsets = [0, 200], sizes = [16, 250], strides = [1, 1]} : vector<16x600xbf16> to vector<16x250xbf16>
    %cst_6 = arith.constant dense<0.000000e+00> : vector<16x32xf32>
    %14 = tpu.matmul %13, %1, %cst_6 {dimension_numbers = #tpu.dot_dimension_numbers<[1], [0], [0], [1], [0, 0, 1, 1], [], []>} : vector<16x250xbf16>, vector<250x32xbf16>, vector<16x32xf32> -> vector<16x32xf32>
    %15 = arith.maximumf %12, %14 : vector<16x32xf32>
    %16 = vector.extract_strided_slice %0 {offsets = [0, 250], sizes = [16, 250], strides = [1, 1]} : vector<16x600xbf16> to vector<16x250xbf16>
    %cst_7 = arith.constant dense<0.000000e+00> : vector<16x32xf32>
    %17 = tpu.matmul %16, %1, %cst_7 {dimension_numbers = #tpu.dot_dimension_numbers<[1], [0], [0], [1], [0, 0, 1, 1], [], []>} : vector<16x250xbf16>, vector<250x32xbf16>, vector<16x32xf32> -> vector<16x32xf32>
    %18 = arith.maximumf %15, %17 : vector<16x32xf32>
    %19 = vector.extract_strided_slice %0 {offsets = [0, 300], sizes = [16, 250], strides = [1, 1]} : vector<16x600xbf16> to vector<16x250xbf16>
    %cst_8 = arith.constant dense<0.000000e+00> : vector<16x32xf32>
    %20 = tpu.matmul %19, %1, %cst_8 {dimension_numbers = #tpu.dot_dimension_numbers<[1], [0], [0], [1], [0, 0, 1, 1], [], []>} : vector<16x250xbf16>, vector<250x32xbf16>, vector<16x32xf32> -> vector<16x32xf32>
    %21 = arith.maximumf %18, %20 : vector<16x32xf32>
    %22 = vector.extract_strided_slice %0 {offsets = [0, 350], sizes = [16, 250], strides = [1, 1]} : vector<16x600xbf16> to vector<16x250xbf16>
    %cst_9 = arith.constant dense<0.000000e+00> : vector<16x32xf32>
    %23 = tpu.matmul %22, %1, %cst_9 {dimension_numbers = #tpu.dot_dimension_numbers<[1], [0], [0], [1], [0, 0, 1, 1], [], []>} : vector<16x250xbf16>, vector<250x32xbf16>, vector<16x32xf32> -> vector<16x32xf32>
    %24 = arith.maximumf %21, %23 : vector<16x32xf32>
    %c0_10 = arith.constant 0 : index
    %c0_11 = arith.constant 0 : index
    %25 = vector.load %arg3[%c0_10, %c0_11] : memref<1x32xf32, #tpu.memory_space<vmem>>, vector<1x32xf32>
    %26 = vector.broadcast %25 : vector<1x32xf32> to vector<16x32xf32>
    %27 = arith.addf %24, %26 : vector<16x32xf32>
    %cst_12 = arith.constant 0.000000e+00 : f32
    %28 = vector.broadcast %cst_12 : f32 to vector<16x32xf32>
    %29 = arith.maximumf %27, %28 : vector<16x32xf32>
    %30 = arith.truncf %29 : vector<16x32xf32> to vector<16x32xbf16>
    %c0_13 = arith.constant 0 : index
    %c0_14 = arith.constant 0 : index
    %31 = vector.load %arg4[%c0_13, %c0_14] : memref<32x64xbf16, #tpu.memory_space<vmem>>, vector<32x64xbf16>
    %cst_15 = arith.constant dense<0.000000e+00> : vector<16x64xf32>
    %32 = tpu.matmul %30, %31, %cst_15 {dimension_numbers = #tpu.dot_dimension_numbers<[1], [0], [0], [1], [0, 0, 1, 1], [], []>} : vector<16x32xbf16>, vector<32x64xbf16>, vector<16x64xf32> -> vector<16x64xf32>
    %c0_16 = arith.constant 0 : index
    %c0_17 = arith.constant 0 : index
    %33 = vector.load %arg5[%c0_16, %c0_17] : memref<1x64xf32, #tpu.memory_space<vmem>>, vector<1x64xf32>
    %34 = vector.broadcast %33 : vector<1x64xf32> to vector<16x64xf32>
    %35 = arith.addf %32, %34 : vector<16x64xf32>
    %36 = vector.extract_strided_slice %35 {offsets = [0, 0], sizes = [16, 32], strides = [1, 1]} : vector<16x64xf32> to vector<16x32xf32>
    %cst_18 = arith.constant 0.000000e+00 : f32
    %37 = vector.broadcast %cst_18 : f32 to vector<16x32xf32>
    %38 = arith.maximumf %36, %37 : vector<16x32xf32>
    %39 = vector.extract_strided_slice %35 {offsets = [0, 32], sizes = [16, 32], strides = [1, 1]} : vector<16x64xf32> to vector<16x32xf32>
    %40 = arith.negf %39 : vector<16x32xf32>
    %41 = math.exp %40 : vector<16x32xf32>
    %cst_19 = arith.constant 1.000000e+00 : f32
    %42 = vector.broadcast %cst_19 : f32 to vector<16x32xf32>
    %43 = arith.addf %42, %41 : vector<16x32xf32>
    %44 = arith.divf %42, %43 : vector<16x32xf32>
    %45 = arith.subf %38, %29 : vector<16x32xf32>
    %46 = arith.mulf %44, %45 : vector<16x32xf32>
    %47 = arith.addf %29, %46 : vector<16x32xf32>
    %c0_20 = arith.constant 0 : index
    %c0_21 = arith.constant 0 : index
    %48 = vector.load %arg6[%c0_20, %c0_21] : memref<16x32xf32, #tpu.memory_space<vmem>>, vector<16x32xf32>
    tpu.vector_store %arg6[%c0_20, %c0_21], %47 {strides = array<i32>} : memref<16x32xf32, #tpu.memory_space<vmem>>, vector<16x32xf32>,
    return
  }
  func.func @transform_0(%arg0: i32) -> (i32, i32) {
    %c0_i32 = arith.constant 0 : i32
    %c0_i32_0 = arith.constant 0 : i32
    return %arg0, %c0_i32 : i32, i32
  }
  func.func @transform_1(%arg0: i32) -> (i32, i32) {
    %c0_i32 = arith.constant 0 : i32
    %c0_i32_0 = arith.constant 0 : i32
    %c0_i32_1 = arith.constant 0 : i32
    return %c0_i32, %c0_i32_0 : i32, i32
  }
  func.func @transform_2(%arg0: i32) -> (i32, i32) {
    %c0_i32 = arith.constant 0 : i32
    %c0_i32_0 = arith.constant 0 : i32
    %c0_i32_1 = arith.constant 0 : i32
    return %c0_i32, %c0_i32_0 : i32, i32
  }
  func.func @transform_3(%arg0: i32) -> (i32, i32) {
    %c0_i32 = arith.constant 0 : i32
    %c0_i32_0 = arith.constant 0 : i32
    %c0_i32_1 = arith.constant 0 : i32
    return %c0_i32, %c0_i32_0 : i32, i32
  }
  func.func @transform_4(%arg0: i32) -> (i32, i32) {
    %c0_i32 = arith.constant 0 : i32
    %c0_i32_0 = arith.constant 0 : i32
    %c0_i32_1 = arith.constant 0 : i32
    return %c0_i32, %c0_i32_0 : i32, i32
  }
  func.func @transform_5(%arg0: i32) -> (i32, i32) {
    %c0_i32 = arith.constant 0 : i32
    %c0_i32_0 = arith.constant 0 : i32
    return %arg0, %c0_i32 : i32, i32
  }
}

</mosaic_0001>

<llo_original>
// kernel: tpu_custom_call.1
$region0: #{tpu_custom_call.1}
  #allocation0 [shape = 'u32[]', space=smem, size = 0x4, offset = 0x4, fixed_abs, tag = 'smem constant byte address 0x4 - core index']
  #allocation1 [shape = 'u32[144,128]{1,0:T(1,128)}', space=vmem, size = 0x12000, scoped, tag = 'internal scratch']
  %s0 = inlined_call_operand.vmem [shape: bf16[16,600], index: 0, kind: input, shape index: {}]
  %s1 = inlined_call_operand.vmem [shape: bf16[250,32], index: 1, kind: input, shape index: {}]
  %s2 = inlined_call_operand.vmem [shape: f32[1,32], index: 2, kind: input, shape index: {}]
  %s3 = inlined_call_operand.vmem [shape: bf16[32,64], index: 3, kind: input, shape index: {}]
  %s4 = inlined_call_operand.vmem [shape: f32[1,64], index: 4, kind: input, shape index: {}]
  %s5 = inlined_call_operand.hbm [shape: f32[16,32], index: 5, kind: output, shape index: {}]
  %s6 = sld [smem:[#allocation0]]
  $region30: #{tpu_custom_call.1} parent=0
    _
  %s8 = ssub.s32 1, %s6
  %s9 = scalar_select 0, %s8, %s6
  $region1: #{tpu_custom_call.1} parent=0
    #allocation2 [shape = 'u8[8192]{0}', space=vmem, size = 0x2000, scoped, tag = 'output window, operand 0, single buffered']
    #allocation3 [shape = 's32[1]{0}', space=sflag, size = 0x4, scoped, tag = 'scoped memory for tpu_custom_call.1']
    %10 = vsyncpa [#allocation3], 0
    // Predicated region
    $region2: #{tpu_custom_call.1} parent=1 // pred_check
      _
    $region3: #{tpu_custom_call.1} parent=1 // pred_check_branch
      %12 = sbr.rel (0) target = $region5
    $region4: #{tpu_custom_call.1} parent=1 // pred_region
      _
    $region5: #{tpu_custom_call.1} parent=1 // pred_fallthru
      _
    // Predicated region
    $region6: #{tpu_custom_call.1} parent=1 // pred_check
      _
    $region7: #{tpu_custom_call.1} parent=1 // pred_check_branch
      %14 = sbr.rel (0) target = $region9
    $region8: #{tpu_custom_call.1} parent=1 // pred_region
      _
    $region9: #{tpu_custom_call.1} parent=1 // pred_fallthru
      _
    // Predicated region
    $region10: #{tpu_custom_call.1} parent=1 // pred_check
      _
    $region11: #{tpu_custom_call.1} parent=1 // pred_check_branch
      %16 = sbr.rel (0) target = $region13
    $region12: #{tpu_custom_call.1} parent=1 // pred_region
      _
    $region13: #{tpu_custom_call.1} parent=1 // pred_fallthru
      _
    // Predicated region
    $region14: #{tpu_custom_call.1} parent=1 // pred_check
      _
    $region15: #{tpu_custom_call.1} parent=1 // pred_check_branch
      %18 = sbr.rel (0) target = $region17
    $region16: #{tpu_custom_call.1} parent=1 // pred_region
      _
    $region17: #{tpu_custom_call.1} parent=1 // pred_fallthru
      _
    // Predicated region
    $region18: #{tpu_custom_call.1} parent=1 // pred_check
      _
    $region19: #{tpu_custom_call.1} parent=1 // pred_check_branch
      %20 = sbr.rel (0) target = $region21
    $region20: #{tpu_custom_call.1} parent=1 // pred_region
      _
    $region21: #{tpu_custom_call.1} parent=1 // pred_fallthru
      _
    %v22 = vld [vmem:[%s0] sm:$0xff]
    %v23 = vld [vmem:[%s0 + $0x8] sm:$0xff]
    %v24 = vld [vmem:[%s0 + $0x10] sm:$0xf]
    %v25 = vld [vmem:[%s0 + $0x14] sm:$0xff]
    %v26 = vld [vmem:[%s0 + $0x1c] sm:$0xff]
    %v27 = vld [vmem:[%s0 + $0x24] sm:$0xf]
    %v28 = vld [vmem:[%s1] sm:$0xf]
    %v29 = vld [vmem:[%s1 + $0x4] sm:$0xf]
    %v30 = vld [vmem:[%s1 + $0x8] sm:$0xf]
    %v31 = vld [vmem:[%s1 + $0xc] sm:$0xf]
    %v32 = vld [vmem:[%s1 + $0x10] sm:$0xf]
    %v33 = vld [vmem:[%s1 + $0x14] sm:$0xf]
    %v34 = vld [vmem:[%s1 + $0x18] sm:$0xf]
    %v35 = vld [vmem:[%s1 + $0x1c] sm:$0xf]
    %v36 = vld [vmem:[%s1 + $0x20] sm:$0xf]
    %v37 = vld [vmem:[%s1 + $0x24] sm:$0xf]
    %v38 = vld [vmem:[%s1 + $0x28] sm:$0xf]
    %v39 = vld [vmem:[%s1 + $0x2c] sm:$0xf]
    %v40 = vld [vmem:[%s1 + $0x30] sm:$0xf]
    %v41 = vld [vmem:[%s1 + $0x34] sm:$0xf]
    %v42 = vld [vmem:[%s1 + $0x38] sm:$0xf]
    %v43 = vld [vmem:[%s1 + $0x3c] sm:$0xf]
    %v44 = vld [vmem:[%s1 + $0x40] sm:$0xf]
    %v45 = vld [vmem:[%s1 + $0x44] sm:$0xf]
    %v46 = vld [vmem:[%s1 + $0x48] sm:$0xf]
    %v47 = vld [vmem:[%s1 + $0x4c] sm:$0xf]
    %v48 = vld [vmem:[%s1 + $0x50] sm:$0xf]
    %v49 = vld [vmem:[%s1 + $0x54] sm:$0xf]
    %v50 = vld [vmem:[%s1 + $0x58] sm:$0xf]
    %v51 = vld [vmem:[%s1 + $0x5c] sm:$0xf]
    %v52 = vld [vmem:[%s1 + $0x60] sm:$0xf]
    %v53 = vld [vmem:[%s1 + $0x64] sm:$0xf]
    %v54 = vld [vmem:[%s1 + $0x68] sm:$0xf]
    %v55 = vld [vmem:[%s1 + $0x6c] sm:$0xf]
    %v56 = vld [vmem:[%s1 + $0x70] sm:$0xf]
    %v57 = vld [vmem:[%s1 + $0x74] sm:$0xf]
    %v58 = vld [vmem:[%s1 + $0x78] sm:$0xf]
    %v59 = vld [vmem:[%s1 + $0x7c] sm:$0x1]
    %v62 = vunpack.c.l.b16 %v22
    %v63 = vunpack.c.h.b16 %v22
    %v64 = vunpack.c.l.b16 %v25
    %v65 = vunpack.c.h.b16 %v25
    %v66 = vpack.c.b16 %v64, %v62
    %v67 = vpack.c.b16 %v65, %v63
    %v101 = vunpack.c.l.b16 %v28
    %v102 = vunpack.c.l.b16 %v29
    %v103 = vunpack.c.l.b16 %v30
    %v104 = vunpack.c.l.b16 %v31
    %v105 = vunpack.c.l.b16 %v32
    %v106 = vunpack.c.l.b16 %v33
    %v107 = vunpack.c.l.b16 %v34
    %v108 = vunpack.c.l.b16 %v35
    %v109 = vunpack.c.l.b16 %v36
    %v110 = vunpack.c.l.b16 %v37
    %v111 = vunpack.c.l.b16 %v38
    %v112 = vunpack.c.l.b16 %v39
    %v113 = vunpack.c.l.b16 %v40
    %v114 = vunpack.c.l.b16 %v41
    %v115 = vunpack.c.l.b16 %v42
    %v116 = vunpack.c.l.b16 %v43
    %v117 = vunpack.c.l.b16 %v44
    %v118 = vunpack.c.l.b16 %v45
    %v119 = vunpack.c.l.b16 %v46
    %v120 = vunpack.c.l.b16 %v47
    %v121 = vunpack.c.l.b16 %v48
    %v122 = vunpack.c.l.b16 %v49
    %v123 = vunpack.c.l.b16 %v50
    %v124 = vunpack.c.l.b16 %v51
    %v125 = vunpack.c.l.b16 %v52
    %v126 = vunpack.c.l.b16 %v53
    %v127 = vunpack.c.l.b16 %v54
    %v128 = vunpack.c.l.b16 %v55
    %v129 = vunpack.c.l.b16 %v56
    %v130 = vunpack.c.l.b16 %v57
    %v131 = vunpack.c.l.b16 %v58
    %v132 = vunpack.c.l.b16 %v59
    %v133 = vpack.c.b16 %v102, %v101
    %v134 = vpack.c.b16 %v104, %v103
    %v135 = vpack.c.b16 %v106, %v105
    %v136 = vpack.c.b16 %v108, %v107
    %v137 = vpack.c.b16 %v110, %v109
    %v138 = vpack.c.b16 %v112, %v111
    %v139 = vpack.c.b16 %v114, %v113
    %v140 = vpack.c.b16 %v116, %v115
    %v141 = vpack.c.b16 %v118, %v117
    %v142 = vpack.c.b16 %v120, %v119
    %v143 = vpack.c.b16 %v122, %v121
    %v144 = vpack.c.b16 %v124, %v123
    %v145 = vpack.c.b16 %v126, %v125
    %v146 = vpack.c.b16 %v128, %v127
    %v147 = vpack.c.b16 %v130, %v129
    %v148 = vpack.c.b16 %v132, %v131
    %vm164 = vcmask 998400
    %v166 = vsel %vm164, %v67, 0
    %vm168 = vcmask 1044480
    %v170 = vsel %vm168, %v148, 0
    %172 = vmatprep.subr.bf16.mxu0 0
    %173 = vmatpush1.bf16.msra.mxu0 %v140
    %174 = vmatprep.subr.bf16.mxu0 0
    %175 = vmatpush1.bf16.msra.mxu0 %v139
    %176 = vmatprep.subr.bf16.mxu0 0
    %177 = vmatpush1.bf16.msra.mxu0 %v138
    %178 = vmatprep.subr.bf16.mxu0 0
    %179 = vmatpush1.bf16.msra.mxu0 %v137
    %180 = vmatprep.subr.bf16.mxu0 0
    %181 = vmatpush1.bf16.msra.mxu0 %v136
    %182 = vmatprep.subr.bf16.mxu0 0
    %183 = vmatpush1.bf16.msra.mxu0 %v135
    %184 = vmatprep.subr.bf16.mxu0 0
    %185 = vmatpush1.bf16.msra.mxu0 %v134
    %186 = vmatprep.subr.bf16.mxu0 0
    %187 = vmatpush1.bf16.msra.mxu0 %v133
    %188 = vmatprep.subr.bf16.mxu0 0
    %189 = vmatpush2.bf16.msra.mxu0 %v170
    %190 = vmatprep.subr.bf16.mxu0 0
    %191 = vmatpush2.bf16.msra.mxu0 %v147
    %192 = vmatprep.subr.bf16.mxu0 0
    %193 = vmatpush2.bf16.msra.mxu0 %v146
    %194 = vmatprep.subr.bf16.mxu0 0
    %195 = vmatpush2.bf16.msra.mxu0 %v145
    %196 = vmatprep.subr.bf16.mxu0 0
    %197 = vmatpush2.bf16.msra.mxu0 %v144
    %198 = vmatprep.subr.bf16.mxu0 0
    %199 = vmatpush2.bf16.msra.mxu0 %v143
    %200 = vmatprep.subr.bf16.mxu0 0
    %201 = vmatpush2.bf16.msra.mxu0 %v142
    %202 = vmatprep.subr.bf16.mxu0 0
    %203 = vmatpush2.bf16.msra.mxu0 %v141
    %204 = vmatprep.mubr.bf16.mxu0 %v166
    %205 = vmatmul.mubr.bf16.gmra.mxu0 %v66
    %v206 = vpop.f32.mrf.mxu0
    %v207 = vadd.f32 0.0, %v206
    %v208 = vpop.f32.mrf.mxu0
    %v209 = vpop.f32.mrf.mxu0
    %v210 = vadd.f32 0.0, %v209
    %v211 = vpop.f32.mrf.mxu0
    %212 = vdwg.mxu0
    %v215 = vunpack.c.l.b16 %v23
    %v216 = vunpack.c.l.b16 %v26
    %v217 = vpack.c.b16 %v216, %v215
    %218 = vrot.lane.b32.xlu0 %v66, 78
    %v219 = vpop.permute.xlu0 %218
    %220 = vrot.lane.b32.xlu0 %v67, 78
    %v221 = vpop.permute.xlu0 %220
    %222 = vrot.lane.b32.xlu0 %v217, 78
    %v223 = vpop.permute.xlu0 %222
    %vm224 = vcmask 637952
    %v225 = vsel %vm224, %v219, %v221
    %v226 = vsel %vm224, %v221, %v223
    %v229 = vsel %vm164, %v226, 0
    %231 = vmatprep.subr.bf16.mxu0 0
    %232 = vmatpush1.bf16.msra.mxu0 %v140
    %233 = vmatprep.subr.bf16.mxu0 0
    %234 = vmatpush1.bf16.msra.mxu0 %v139
    %235 = vmatprep.subr.bf16.mxu0 0
    %236 = vmatpush1.bf16.msra.mxu0 %v138
    %237 = vmatprep.subr.bf16.mxu0 0
    %238 = vmatpush1.bf16.msra.mxu0 %v137
    %239 = vmatprep.subr.bf16.mxu0 0
    %240 = vmatpush1.bf16.msra.mxu0 %v136
    %241 = vmatprep.subr.bf16.mxu0 0
    %242 = vmatpush1.bf16.msra.mxu0 %v135
    %243 = vmatprep.subr.bf16.mxu0 0
    %244 = vmatpush1.bf16.msra.mxu0 %v134
    %245 = vmatprep.subr.bf16.mxu0 0
    %246 = vmatpush1.bf16.msra.mxu0 %v133
    %247 = vmatprep.subr.bf16.mxu0 0
    %248 = vmatpush2.bf16.msra.mxu0 %v170
    %249 = vmatprep.subr.bf16.mxu0 0
    %250 = vmatpush2.bf16.msra.mxu0 %v147
    %251 = vmatprep.subr.bf16.mxu0 0
    %252 = vmatpush2.bf16.msra.mxu0 %v146
    %253 = vmatprep.subr.bf16.mxu0 0
    %254 = vmatpush2.bf16.msra.mxu0 %v145
    %255 = vmatprep.subr.bf16.mxu0 0
    %256 = vmatpush2.bf16.msra.mxu0 %v144
    %257 = vmatprep.subr.bf16.mxu0 0
    %258 = vmatpush2.bf16.msra.mxu0 %v143
    %259 = vmatprep.subr.bf16.mxu0 0
    %260 = vmatpush2.bf16.msra.mxu0 %v142
    %261 = vmatprep.subr.bf16.mxu0 0
    %262 = vmatpush2.bf16.msra.mxu0 %v141
    %263 = vmatprep.mubr.bf16.mxu0 %v229
    %264 = vmatmul.mubr.bf16.gmra.mxu0 %v225
    %v265 = vpop.f32.mrf.mxu0
    %v266 = vadd.f32 0.0, %v265
    %v267 = vpop.f32.mrf.mxu0
    %v268 = vpop.f32.mrf.mxu0
    %v269 = vadd.f32 0.0, %v268
    %v270 = vpop.f32.mrf.mxu0
    %271 = vdwg.mxu0
    %v272 = vmax.f32 %v207, %v266
    %v273 = vmax.f32 %v210, %v269
    %274 = vrot.lane.b32.xlu0 %v66, 28
    %v275 = vpop.permute.xlu0 %274
    %276 = vrot.lane.b32.xlu0 %v67, 28
    %v277 = vpop.permute.xlu0 %276
    %278 = vrot.lane.b32.xlu0 %v217, 28
    %v279 = vpop.permute.xlu0 %278
    %vm280 = vcmask 228352
    %v281 = vsel %vm280, %v275, %v277
    %v282 = vsel %vm280, %v277, %v279
    %v285 = vsel %vm164, %v282, 0
    %287 = vmatprep.subr.bf16.mxu0 0
    %288 = vmatpush1.bf16.msra.mxu0 %v140
    %289 = vmatprep.subr.bf16.mxu0 0
    %290 = vmatpush1.bf16.msra.mxu0 %v139
    %291 = vmatprep.subr.bf16.mxu0 0
    %292 = vmatpush1.bf16.msra.mxu0 %v138
    %293 = vmatprep.subr.bf16.mxu0 0
    %294 = vmatpush1.bf16.msra.mxu0 %v137
    %295 = vmatprep.subr.bf16.mxu0 0
    %296 = vmatpush1.bf16.msra.mxu0 %v136
    %297 = vmatprep.subr.bf16.mxu0 0
    %298 = vmatpush1.bf16.msra.mxu0 %v135
    %299 = vmatprep.subr.bf16.mxu0 0
    %300 = vmatpush1.bf16.msra.mxu0 %v134
    %301 = vmatprep.subr.bf16.mxu0 0
    %302 = vmatpush1.bf16.msra.mxu0 %v133
    %303 = vmatprep.subr.bf16.mxu0 0
    %304 = vmatpush2.bf16.msra.mxu0 %v170
    %305 = vmatprep.subr.bf16.mxu0 0
    %306 = vmatpush2.bf16.msra.mxu0 %v147
    %307 = vmatprep.subr.bf16.mxu0 0
    %308 = vmatpush2.bf16.msra.mxu0 %v146
    %309 = vmatprep.subr.bf16.mxu0 0
    %310 = vmatpush2.bf16.msra.mxu0 %v145
    %311 = vmatprep.subr.bf16.mxu0 0
    %312 = vmatpush2.bf16.msra.mxu0 %v144
    %313 = vmatprep.subr.bf16.mxu0 0
    %314 = vmatpush2.bf16.msra.mxu0 %v143
    %315 = vmatprep.subr.bf16.mxu0 0
    %316 = vmatpush2.bf16.msra.mxu0 %v142
    %317 = vmatprep.subr.bf16.mxu0 0
    %318 = vmatpush2.bf16.msra.mxu0 %v141
    %319 = vmatprep.mubr.bf16.mxu0 %v285
    %320 = vmatmul.mubr.bf16.gmra.mxu0 %v281
    %v321 = vpop.f32.mrf.mxu0
    %v322 = vadd.f32 0.0, %v321
    %v323 = vpop.f32.mrf.mxu0
    %v324 = vpop.f32.mrf.mxu0
    %v325 = vadd.f32 0.0, %v324
    %v326 = vpop.f32.mrf.mxu0
    %327 = vdwg.mxu0
    %v328 = vmax.f32 %v272, %v322
    %v329 = vmax.f32 %v273, %v325
    %v330 = vunpack.c.h.b16 %v23
    %v331 = vunpack.c.h.b16 %v26
    %v332 = vpack.c.b16 %v331, %v330
    %333 = vrot.lane.b32.xlu0 %v67, 106
    %v334 = vpop.permute.xlu0 %333
    %335 = vrot.lane.b32.xlu0 %v217, 106
    %v336 = vpop.permute.xlu0 %335
    %337 = vrot.lane.b32.xlu0 %v332, 106
    %v338 = vpop.permute.xlu0 %337
    %vm339 = vcmask 867328
    %v340 = vsel %vm339, %v334, %v336
    %v341 = vsel %vm339, %v336, %v338
    %v344 = vsel %vm164, %v341, 0
    %346 = vmatprep.subr.bf16.mxu0 0
    %347 = vmatpush1.bf16.msra.mxu0 %v140
    %348 = vmatprep.subr.bf16.mxu0 0
    %349 = vmatpush1.bf16.msra.mxu0 %v139
    %350 = vmatprep.subr.bf16.mxu0 0
    %351 = vmatpush1.bf16.msra.mxu0 %v138
    %352 = vmatprep.subr.bf16.mxu0 0
    %353 = vmatpush1.bf16.msra.mxu0 %v137
    %354 = vmatprep.subr.bf16.mxu0 0
    %355 = vmatpush1.bf16.msra.mxu0 %v136
    %356 = vmatprep.subr.bf16.mxu0 0
    %357 = vmatpush1.bf16.msra.mxu0 %v135
    %358 = vmatprep.subr.bf16.mxu0 0
    %359 = vmatpush1.bf16.msra.mxu0 %v134
    %360 = vmatprep.subr.bf16.mxu0 0
    %361 = vmatpush1.bf16.msra.mxu0 %v133
    %362 = vmatprep.subr.bf16.mxu0 0
    %363 = vmatpush2.bf16.msra.mxu0 %v170
    %364 = vmatprep.subr.bf16.mxu0 0
    %365 = vmatpush2.bf16.msra.mxu0 %v147
    %366 = vmatprep.subr.bf16.mxu0 0
    %367 = vmatpush2.bf16.msra.mxu0 %v146
    %368 = vmatprep.subr.bf16.mxu0 0
    %369 = vmatpush2.bf16.msra.mxu0 %v145
    %370 = vmatprep.subr.bf16.mxu0 0
    %371 = vmatpush2.bf16.msra.mxu0 %v144
    %372 = vmatprep.subr.bf16.mxu0 0
    %373 = vmatpush2.bf16.msra.mxu0 %v143
    %374 = vmatprep.subr.bf16.mxu0 0
    %375 = vmatpush2.bf16.msra.mxu0 %v142
    %376 = vmatprep.subr.bf16.mxu0 0
    %377 = vmatpush2.bf16.msra.mxu0 %v141
    %378 = vmatprep.mubr.bf16.mxu0 %v344
    %379 = vmatmul.mubr.bf16.gmra.mxu0 %v340
    %v380 = vpop.f32.mrf.mxu0
    %v381 = vadd.f32 0.0, %v380
    %v382 = vpop.f32.mrf.mxu0
    %v383 = vpop.f32.mrf.mxu0
    %v384 = vadd.f32 0.0, %v383
    %v385 = vpop.f32.mrf.mxu0
    %386 = vdwg.mxu0
    %v387 = vmax.f32 %v328, %v381
    %v388 = vmax.f32 %v329, %v384
    %389 = vrot.lane.b32.xlu0 %v67, 56
    %v390 = vpop.permute.xlu0 %389
    %391 = vrot.lane.b32.xlu0 %v217, 56
    %v392 = vpop.permute.xlu0 %391
    %393 = vrot.lane.b32.xlu0 %v332, 56
    %v394 = vpop.permute.xlu0 %393
    %vm395 = vcmask 457728
    %v396 = vsel %vm395, %v390, %v392
    %v397 = vsel %vm395, %v392, %v394
    %v400 = vsel %vm164, %v397, 0
    %402 = vmatprep.subr.bf16.mxu0 0
    %403 = vmatpush1.bf16.msra.mxu0 %v140
    %404 = vmatprep.subr.bf16.mxu0 0
    %405 = vmatpush1.bf16.msra.mxu0 %v139
    %406 = vmatprep.subr.bf16.mxu0 0
    %407 = vmatpush1.bf16.msra.mxu0 %v138
    %408 = vmatprep.subr.bf16.mxu0 0
    %409 = vmatpush1.bf16.msra.mxu0 %v137
    %410 = vmatprep.subr.bf16.mxu0 0
    %411 = vmatpush1.bf16.msra.mxu0 %v136
    %412 = vmatprep.subr.bf16.mxu0 0
    %413 = vmatpush1.bf16.msra.mxu0 %v135
    %414 = vmatprep.subr.bf16.mxu0 0
    %415 = vmatpush1.bf16.msra.mxu0 %v134
    %416 = vmatprep.subr.bf16.mxu0 0
    %417 = vmatpush1.bf16.msra.mxu0 %v133
    %418 = vmatprep.subr.bf16.mxu0 0
    %419 = vmatpush2.bf16.msra.mxu0 %v170
    %420 = vmatprep.subr.bf16.mxu0 0
    %421 = vmatpush2.bf16.msra.mxu0 %v147
    %422 = vmatprep.subr.bf16.mxu0 0
    %423 = vmatpush2.bf16.msra.mxu0 %v146
    %424 = vmatprep.subr.bf16.mxu0 0
    %425 = vmatpush2.bf16.msra.mxu0 %v145
    %426 = vmatprep.subr.bf16.mxu0 0
    %427 = vmatpush2.bf16.msra.mxu0 %v144
    %428 = vmatprep.subr.bf16.mxu0 0
    %429 = vmatpush2.bf16.msra.mxu0 %v143
    %430 = vmatprep.subr.bf16.mxu0 0
    %431 = vmatpush2.bf16.msra.mxu0 %v142
    %432 = vmatprep.subr.bf16.mxu0 0
    %433 = vmatpush2.bf16.msra.mxu0 %v141
    %434 = vmatprep.mubr.bf16.mxu0 %v400
    %435 = vmatmul.mubr.bf16.gmra.mxu0 %v396
    %v436 = vpop.f32.mrf.mxu0
    %v437 = vadd.f32 0.0, %v436
    %v438 = vpop.f32.mrf.mxu0
    %v439 = vpop.f32.mrf.mxu0
    %v440 = vadd.f32 0.0, %v439
    %v441 = vpop.f32.mrf.mxu0
    %442 = vdwg.mxu0
    %v443 = vmax.f32 %v387, %v437
    %v444 = vmax.f32 %v388, %v440
    %445 = vrot.lane.b32.xlu0 %v67, 6
    %v446 = vpop.permute.xlu0 %445
    %447 = vrot.lane.b32.xlu0 %v217, 6
    %v448 = vpop.permute.xlu0 %447
    %449 = vrot.lane.b32.xlu0 %v332, 6
    %v450 = vpop.permute.xlu0 %449
    %vm451 = vcmask 48128
    %v452 = vsel %vm451, %v446, %v448
    %v453 = vsel %vm451, %v448, %v450
    %v456 = vsel %vm164, %v453, 0
    %458 = vmatprep.subr.bf16.mxu0 0
    %459 = vmatpush1.bf16.msra.mxu0 %v140
    %460 = vmatprep.subr.bf16.mxu0 0
    %461 = vmatpush1.bf16.msra.mxu0 %v139
    %462 = vmatprep.subr.bf16.mxu0 0
    %463 = vmatpush1.bf16.msra.mxu0 %v138
    %464 = vmatprep.subr.bf16.mxu0 0
    %465 = vmatpush1.bf16.msra.mxu0 %v137
    %466 = vmatprep.subr.bf16.mxu0 0
    %467 = vmatpush1.bf16.msra.mxu0 %v136
    %468 = vmatprep.subr.bf16.mxu0 0
    %469 = vmatpush1.bf16.msra.mxu0 %v135
    %470 = vmatprep.subr.bf16.mxu0 0
    %471 = vmatpush1.bf16.msra.mxu0 %v134
    %472 = vmatprep.subr.bf16.mxu0 0
    %473 = vmatpush1.bf16.msra.mxu0 %v133
    %474 = vmatprep.subr.bf16.mxu0 0
    %475 = vmatpush2.bf16.msra.mxu0 %v170
    %476 = vmatprep.subr.bf16.mxu0 0
    %477 = vmatpush2.bf16.msra.mxu0 %v147
    %478 = vmatprep.subr.bf16.mxu0 0
    %479 = vmatpush2.bf16.msra.mxu0 %v146
    %480 = vmatprep.subr.bf16.mxu0 0
    %481 = vmatpush2.bf16.msra.mxu0 %v145
    %482 = vmatprep.subr.bf16.mxu0 0
    %483 = vmatpush2.bf16.msra.mxu0 %v144
    %484 = vmatprep.subr.bf16.mxu0 0
    %485 = vmatpush2.bf16.msra.mxu0 %v143
    %486 = vmatprep.subr.bf16.mxu0 0
    %487 = vmatpush2.bf16.msra.mxu0 %v142
    %488 = vmatprep.subr.bf16.mxu0 0
    %489 = vmatpush2.bf16.msra.mxu0 %v141
    %490 = vmatprep.mubr.bf16.mxu0 %v456
    %491 = vmatmul.mubr.bf16.gmra.mxu0 %v452
    %v492 = vpop.f32.mrf.mxu0
    %v493 = vadd.f32 0.0, %v492
    %v494 = vpop.f32.mrf.mxu0
    %v495 = vpop.f32.mrf.mxu0
    %v496 = vadd.f32 0.0, %v495
    %v497 = vpop.f32.mrf.mxu0
    %498 = vdwg.mxu0
    %v499 = vmax.f32 %v443, %v493
    %v500 = vmax.f32 %v444, %v496
    %v503 = vunpack.c.l.b16 %v24
    %v504 = vunpack.c.l.b16 %v27
    %v505 = vpack.c.b16 %v504, %v503
    %506 = vrot.lane.b32.xlu0 %v217, 84
    %v507 = vpop.permute.xlu0 %506
    %508 = vrot.lane.b32.xlu0 %v332, 84
    %v509 = vpop.permute.xlu0 %508
    %510 = vrot.lane.b32.xlu0 %v505, 84
    %v511 = vpop.permute.xlu0 %510
    %vm512 = vcmask 687104
    %v513 = vsel %vm512, %v507, %v509
    %v514 = vsel %vm512, %v509, %v511
    %v517 = vsel %vm164, %v514, 0
    %519 = vmatprep.subr.bf16.mxu0 0
    %520 = vmatpush1.bf16.msra.mxu0 %v140
    %521 = vmatprep.subr.bf16.mxu0 0
    %522 = vmatpush1.bf16.msra.mxu0 %v139
    %523 = vmatprep.subr.bf16.mxu0 0
    %524 = vmatpush1.bf16.msra.mxu0 %v138
    %525 = vmatprep.subr.bf16.mxu0 0
    %526 = vmatpush1.bf16.msra.mxu0 %v137
    %527 = vmatprep.subr.bf16.mxu0 0
    %528 = vmatpush1.bf16.msra.mxu0 %v136
    %529 = vmatprep.subr.bf16.mxu0 0
    %530 = vmatpush1.bf16.msra.mxu0 %v135
    %531 = vmatprep.subr.bf16.mxu0 0
    %532 = vmatpush1.bf16.msra.mxu0 %v134
    %533 = vmatprep.subr.bf16.mxu0 0
    %534 = vmatpush1.bf16.msra.mxu0 %v133
    %535 = vmatprep.subr.bf16.mxu0 0
    %536 = vmatpush2.bf16.msra.mxu0 %v170
    %537 = vmatprep.subr.bf16.mxu0 0
    %538 = vmatpush2.bf16.msra.mxu0 %v147
    %539 = vmatprep.subr.bf16.mxu0 0
    %540 = vmatpush2.bf16.msra.mxu0 %v146
    %541 = vmatprep.subr.bf16.mxu0 0
    %542 = vmatpush2.bf16.msra.mxu0 %v145
    %543 = vmatprep.subr.bf16.mxu0 0
    %544 = vmatpush2.bf16.msra.mxu0 %v144
    %545 = vmatprep.subr.bf16.mxu0 0
    %546 = vmatpush2.bf16.msra.mxu0 %v143
    %547 = vmatprep.subr.bf16.mxu0 0
    %548 = vmatpush2.bf16.msra.mxu0 %v142
    %549 = vmatprep.subr.bf16.mxu0 0
    %550 = vmatpush2.bf16.msra.mxu0 %v141
    %551 = vmatprep.mubr.bf16.mxu0 %v517
    %552 = vmatmul.mubr.bf16.gmra.mxu0 %v513
    %v553 = vpop.f32.mrf.mxu0
    %v554 = vadd.f32 0.0, %v553
    %v555 = vpop.f32.mrf.mxu0
    %v556 = vpop.f32.mrf.mxu0
    %v557 = vadd.f32 0.0, %v556
    %v558 = vpop.f32.mrf.mxu0
    %559 = vdwg.mxu0
    %v560 = vmax.f32 %v499, %v554
    %v561 = vmax.f32 %v500, %v557
    %562 = vrot.lane.b32.xlu0 %v217, 34
    %v563 = vpop.permute.xlu0 %562
    %564 = vrot.lane.b32.xlu0 %v332, 34
    %v565 = vpop.permute.xlu0 %564
    %566 = vrot.lane.b32.xlu0 %v505, 34
    %v567 = vpop.permute.xlu0 %566
    %vm568 = vcmask 277504
    %v569 = vsel %vm568, %v563, %v565
    %v570 = vsel %vm568, %v565, %v567
    %v573 = vsel %vm164, %v570, 0
    %575 = vmatprep.subr.bf16.mxu0 0
    %576 = vmatpush1.bf16.msra.mxu0 %v140
    %577 = vmatprep.subr.bf16.mxu0 0
    %578 = vmatpush1.bf16.msra.mxu0 %v139
    %579 = vmatprep.subr.bf16.mxu0 0
    %580 = vmatpush1.bf16.msra.mxu0 %v138
    %581 = vmatprep.subr.bf16.mxu0 0
    %582 = vmatpush1.bf16.msra.mxu0 %v137
    %583 = vmatprep.subr.bf16.mxu0 0
    %584 = vmatpush1.bf16.msra.mxu0 %v136
    %585 = vmatprep.subr.bf16.mxu0 0
    %586 = vmatpush1.bf16.msra.mxu0 %v135
    %587 = vmatprep.subr.bf16.mxu0 0
    %588 = vmatpush1.bf16.msra.mxu0 %v134
    %589 = vmatprep.subr.bf16.mxu0 0
    %590 = vmatpush1.bf16.msra.mxu0 %v133
    %591 = vmatprep.subr.bf16.mxu0 0
    %592 = vmatpush2.bf16.msra.mxu0 %v170
    %593 = vmatprep.subr.bf16.mxu0 0
    %594 = vmatpush2.bf16.msra.mxu0 %v147
    %595 = vmatprep.subr.bf16.mxu0 0
    %596 = vmatpush2.bf16.msra.mxu0 %v146
    %597 = vmatprep.subr.bf16.mxu0 0
    %598 = vmatpush2.bf16.msra.mxu0 %v145
    %599 = vmatprep.subr.bf16.mxu0 0
    %600 = vmatpush2.bf16.msra.mxu0 %v144
    %601 = vmatprep.subr.bf16.mxu0 0
    %602 = vmatpush2.bf16.msra.mxu0 %v143
    %603 = vmatprep.subr.bf16.mxu0 0
    %604 = vmatpush2.bf16.msra.mxu0 %v142
    %605 = vmatprep.subr.bf16.mxu0 0
    %606 = vmatpush2.bf16.msra.mxu0 %v141
    %607 = vmatprep.mubr.bf16.mxu0 %v573
    %608 = vmatmul.mubr.bf16.gmra.mxu0 %v569
    %v609 = vpop.f32.mrf.mxu0
    %v610 = vadd.f32 0.0, %v609
    %v611 = vpop.f32.mrf.mxu0
    %v612 = vpop.f32.mrf.mxu0
    %v613 = vadd.f32 0.0, %v612
    %v614 = vpop.f32.mrf.mxu0
    %615 = vdwg.mxu0
    %v616 = vmax.f32 %v560, %v610
    %v617 = vmax.f32 %v561, %v613
    %v618 = vld [vmem:[%s2] sm:$0x1]
    %v620 = vlaneseq
    %v621 = vshrl.u32 %v620, 7
    %v622 = vsub.s32 0, %v621
    %v623 = vrot.slane %v618, %v622
    %v625 = vadd.f32 %v616, %v623
    %v626 = vadd.f32 %v617, %v623
    %v627 = vmax.f32 %v625, 0.0
    %v628 = vmax.f32 %v626, 0.0
    %v629 = vpack.c.bf16 %v628, %v627
    %v630 = vld [vmem:[%s3] sm:$0xf]
    %v631 = vld [vmem:[%s3 + $0x4] sm:$0xf]
    %v632 = vld [vmem:[%s3 + $0x8] sm:$0xf]
    %v633 = vld [vmem:[%s3 + $0xc] sm:$0xf]
    %v634 = vld [vmem:[%s4] sm:$0x1]
    %v636 = vlaneseq
    %v637 = vshrl.u32 %v636, 7
    %v638 = vsub.s32 0, %v637
    %v639 = vrot.slane %v634, %v638
    %v645 = vunpack.c.l.b16 %v630
    %v646 = vunpack.c.l.b16 %v631
    %v647 = vunpack.c.l.b16 %v632
    %v648 = vunpack.c.l.b16 %v633
    %v649 = vpack.c.b16 %v646, %v645
    %v650 = vpack.c.b16 %v648, %v647
    %vm653 = vcmask 261120
    %v655 = vsel %vm653, %v629, 0
    %657 = vmatprep.subr.bf16.mxu0 0
    %658 = vmatpush1.bf16.msra.mxu0 0
    %659 = vmatprep.subr.bf16.mxu0 0
    %660 = vmatpush1.bf16.msra.mxu0 0
    %661 = vmatprep.subr.bf16.mxu0 0
    %662 = vmatpush1.bf16.msra.mxu0 0
    %663 = vmatprep.subr.bf16.mxu0 0
    %664 = vmatpush1.bf16.msra.mxu0 0
    %665 = vmatprep.subr.bf16.mxu0 0
    %666 = vmatpush1.bf16.msra.mxu0 0
    %667 = vmatprep.subr.bf16.mxu0 0
    %668 = vmatpush1.bf16.msra.mxu0 0
    %669 = vmatprep.subr.bf16.mxu0 0
    %670 = vmatpush1.bf16.msra.mxu0 %v650
    %671 = vmatprep.subr.bf16.mxu0 0
    %672 = vmatpush1.bf16.msra.mxu0 %v649
    %673 = vmatprep.subr.bf16.mxu0 0
    %674 = vmatpush2.bf16.msra.mxu0 0
    %675 = vmatprep.subr.bf16.mxu0 0
    %676 = vmatpush2.bf16.msra.mxu0 0
    %677 = vmatprep.subr.bf16.mxu0 0
    %678 = vmatpush2.bf16.msra.mxu0 0
    %679 = vmatprep.subr.bf16.mxu0 0
    %680 = vmatpush2.bf16.msra.mxu0 0
    %681 = vmatprep.subr.bf16.mxu0 0
    %682 = vmatpush2.bf16.msra.mxu0 0
    %683 = vmatprep.subr.bf16.mxu0 0
    %684 = vmatpush2.bf16.msra.mxu0 0
    %685 = vmatprep.subr.bf16.mxu0 0
    %686 = vmatpush2.bf16.msra.mxu0 0
    %687 = vmatprep.subr.bf16.mxu0 0
    %688 = vmatpush2.bf16.msra.mxu0 0
    %689 = vmatprep.mubr.bf16.mxu0 0
    %690 = vmatmul.mubr.bf16.gmra.mxu0 %v655
    %v691 = vpop.f32.mrf.mxu0
    %v692 = vadd.f32 %v639, %v691
    %v693 = vpop.f32.mrf.mxu0
    %v694 = vpop.f32.mrf.mxu0
    %v695 = vadd.f32 %v639, %v694
    %v696 = vpop.f32.mrf.mxu0
    %697 = vdwg.mxu0
    %v698 = vmax.f32 %v692, 0.0
    %v699 = vmax.f32 %v695, 0.0
    %v700 = vxor.u32 %v692, 2147483648
    %v701 = vxor.u32 %v695, 2147483648
    %v702 = vmul.f32 %v700, 1.442695
    %v703 = vpow.pop %v702
    %v704 = vmul.f32 %v701, 1.442695
    %v705 = vpow.pop %v704
    %v706 = vadd.f32 %v703, 1.0
    %v707 = vadd.f32 %v705, 1.0
    %v708 = vrcp.pop %v706
    %v709 = vmul.f32 1.0, %v708
    %v710 = vrcp.pop %v707
    %v711 = vmul.f32 1.0, %v710
    %v712 = vsub.f32 %v698, %v627
    %v713 = vsub.f32 %v699, %v628
    %716 = vrot.lane.b32.xlu0 %v712, 32
    %v717 = vpop.permute.xlu0 %716
    %718 = vrot.lane.b32.xlu0 %v713, 32
    %v719 = vpop.permute.xlu0 %718
    %v722 = vmul.f32 %v709, %v717
    %v723 = vmul.f32 %v711, %v719
    %726 = vrot.lane.b32.xlu0 %v722, 96
    %v727 = vpop.permute.xlu0 %726
    %728 = vrot.lane.b32.xlu0 %v723, 96
    %v729 = vpop.permute.xlu0 %728
    %v732 = vadd.f32 %v627, %v727
    %v733 = vadd.f32 %v628, %v729
    %734 = vst.msk [vmem:[#allocation2] sm:$0xff] %vm653, %v732
    %735 = vst.msk [vmem:[#allocation2 + $0x8] sm:$0xff] %vm653, %v733
    // Predicated region
    $region22: #{tpu_custom_call.1} parent=1 // pred_check
      _
    $region23: #{tpu_custom_call.1} parent=1 // pred_check_branch
      %737 = sbr.rel (0) target = $region25
    $region24: #{tpu_custom_call.1} parent=1 // pred_region
      %s739 = ssub.s32 256, 256
      %740 = vsyncadd [#allocation3], %s739
      %s741 = sshll.u32 [#allocation2], 4
      %s742 = int_to_ptr.vmem [resolvable:$true] %s741
      %747 = dma.vmem_to_hbm [thread:$0]  %s742, 256, %s5, [#allocation3], 128, 128, 8
    $region25: #{tpu_custom_call.1} parent=1 // pred_fallthru
      _
    // Predicated region
    $region26: #{tpu_custom_call.1} parent=1 // pred_check
      _
    $region27: #{tpu_custom_call.1} parent=1 // pred_check_branch
      %749 = sbr.rel (0) target = $region29
    $region28: #{tpu_custom_call.1} parent=1 // pred_region
      %750 = dma.done [#allocation3], 256
    $region29: #{tpu_custom_call.1} parent=1 // pred_fallthru
      _
    %751 = vsyncpa [#allocation3], 1

</llo_original>
